<compile_context>
chip_gen: v5e
topology: v5e:2x2
jax: 0.10.0
libtpu: 0.0.40
codegen_flags: <defaults>
</compile_context>

<pallas_src>
import functools
import math

import jax
import jax.numpy as jnp
from jax.experimental import pallas as pl
from jax.experimental.pallas import tpu as pltpu


# ---------------------------------------------------------------------------
# Kernels
# ---------------------------------------------------------------------------

def _softmax_last_axis_kernel(x_ref, o_ref, *, alpha):
    """Numerically stable softmax(alpha * x) over the last (lane) axis."""
    x = x_ref[...].astype(jnp.float32) * jnp.float32(alpha)
    m = jnp.max(x, axis=-1, keepdims=True)
    e = jnp.exp(x - m)
    s = jnp.sum(e, axis=-1, keepdims=True)
    o_ref[...] = (e * pl.reciprocal(s, approx=False)).astype(o_ref.dtype)


def _softmax_sublane_axis_kernel(x_ref, o_ref, *, alpha):
    """softmax(alpha * x) over axis -2 of a (TB, K, TN) block.

    Keeps the flattened tail axis on lanes (lane-dense, unmasked stores) and
    avoids the HBM transpose a jnp.moveaxis-based approach would materialize.
    """
    x = x_ref[...].astype(jnp.float32) * jnp.float32(alpha)
    m = jnp.max(x, axis=-2, keepdims=True)
    e = jnp.exp(x - m)
    s = jnp.sum(e, axis=-2, keepdims=True)
    o_ref[...] = (e * pl.reciprocal(s, approx=False)).astype(o_ref.dtype)


# ---------------------------------------------------------------------------
# Wrapper
# ---------------------------------------------------------------------------

# ~2 MiB per input tile: with double-buffered input + output (4x tile) plus
# f32 temporaries this stays comfortably under the scoped-VMEM defaults
# (~16 MiB v5e, ~32 MiB v6e/v7x), while tiles this size already sit on the
# measured HBM-roofline plateau for mem-bound elementwise/reduction kernels.
_TILE_TARGET_BYTES = 2 << 20


def _round_down_multiple(x, m):
    return max(m, (x // m) * m)


def softmax_with_temperature(x, dim=0, alpha=1.0):
    """Pallas equivalent of SoftmaxWithTemperature(dim, alpha).forward(x)."""
    ndim = x.ndim
    dim = dim % ndim

    if dim == ndim - 1:
        # ---- softmax over the last axis: rows on sublanes, reduce on lanes.
        n = x.shape[-1]
        m_rows = int(math.prod(x.shape[:-1]))
        x2 = x.reshape(m_rows, n)

        row_bytes = max(1, n * 4)
        tm = _round_down_multiple(min(m_rows, _TILE_TARGET_BYTES // row_bytes), 8)
        if tm >= m_rows:
            tm = m_rows  # full extent is always a legal block shape
        grid_m = pl.cdiv(m_rows, tm)

        out2 = pl.pallas_call(
            functools.partial(_softmax_last_axis_kernel, alpha=alpha),
            out_shape=jax.ShapeDtypeStruct((m_rows, n), x.dtype),
            grid=(grid_m,),
            in_specs=[pl.BlockSpec((tm, n), lambda i: (i, 0))],
            out_specs=pl.BlockSpec((tm, n), lambda i: (i, 0)),
            compiler_params=pltpu.CompilerParams(
                dimension_semantics=("parallel",)),
        )(x2)
        return out2.reshape(x.shape)

    # ---- softmax over a non-last axis: transpose-free reshape to (B, K, N),
    #      reduce over K (sublanes); the flattened tail axis N sits on lanes.
    b = int(math.prod(x.shape[:dim]))
    k = x.shape[dim]
    n = int(math.prod(x.shape[dim + 1:]))
    x3 = x.reshape(b, k, n)

    col_bytes = max(1, k * 4)
    tn = _round_down_multiple(min(n, _TILE_TARGET_BYTES // col_bytes), 128)
    if tn >= n:
        tn = n  # full extent satisfies the (8,128) constraint
    grid_n = pl.cdiv(n, tn)

    # Pack several B rows per grid step when a single (K, TN) slab is small,
    # so the ~0.35 us per-grid-step overhead is amortized.
    slab_bytes = max(1, k * tn * 4)
    tb = max(1, min(b, _TILE_TARGET_BYTES // slab_bytes))
    grid_b = pl.cdiv(b, tb)

    out3 = pl.pallas_call(
        functools.partial(_softmax_sublane_axis_kernel, alpha=alpha),
        out_shape=jax.ShapeDtypeStruct((b, k, n), x.dtype),
        grid=(grid_b, grid_n),
        in_specs=[pl.BlockSpec((tb, k, tn), lambda ib, jn: (ib, 0, jn))],
        out_specs=pl.BlockSpec((tb, k, tn), lambda ib, jn: (ib, 0, jn)),
        compiler_params=pltpu.CompilerParams(
            dimension_semantics=("parallel", "parallel")),
    )(x3)
    return out3.reshape(x.shape)


if __name__ == "__main__":
    key = jax.random.PRNGKey(0)
    k1, k2, k3 = jax.random.split(key, 3)

    # Module default dim=0 with a non-trivial temperature.
    dim, alpha = 0, 0.7
    x = jax.random.normal(k1, (8, 32), dtype=jnp.float32)   # (seq=8, hidden=32)
    out = jax.block_until_ready(softmax_with_temperature(x, dim=dim, alpha=alpha))
    ref = jax.nn.softmax(alpha * x, axis=dim)
    assert out.shape == x.shape and out.dtype == x.dtype
    assert jnp.allclose(out, ref, atol=1e-6, rtol=1e-6), "dim=0 mismatch vs reference"

    # Last-axis (lane-reduction) code path.
    y = jax.random.normal(k2, (2, 4, 32), dtype=jnp.float32)
    out_y = jax.block_until_ready(softmax_with_temperature(y, dim=-1, alpha=1.3))
    ref_y = jax.nn.softmax(1.3 * y, axis=-1)
    assert jnp.allclose(out_y, ref_y, atol=1e-6, rtol=1e-6), "dim=-1 mismatch vs reference"

    # Middle-axis path with b > 1 (exercises batched sublane-reduction tiling).
    z = jax.random.normal(k3, (2, 4, 16, 16), dtype=jnp.float32)
    out_z = jax.block_until_ready(softmax_with_temperature(z, dim=1, alpha=0.5))
    ref_z = jax.nn.softmax(0.5 * z, axis=1)
    assert jnp.allclose(out_z, ref_z, atol=1e-6, rtol=1e-6), "dim=1 mismatch vs reference"

    print("KERNEL_OK")
</pallas_src>

<mosaic_0001>
module attributes {stable_mosaic.version = 11 : i64} {
  func.func @_softmax_sublane_axis_kernel(%arg0: i32, %arg1: i32, %arg2: memref<1x8x32xf32, #tpu.memory_space<vmem>>, %arg3: memref<1x8x32xf32, #tpu.memory_space<vmem>>) attributes {dimension_semantics = [#tpu.dimension_semantics<parallel>, #tpu.dimension_semantics<parallel>], iteration_bounds = array<i64: 1, 1>, scalar_prefetch = 0 : i64, scratch_operands = 0 : i64, tpu.core_type = #tpu.core_type<tc>, window_params = [{transform_indices = @transform_0, window_bounds = array<i64: 1, 8, 32>}, {transform_indices = @transform_1, window_bounds = array<i64: 1, 8, 32>}]} {
    %c0 = arith.constant 0 : index
    %c0_0 = arith.constant 0 : index
    %c0_1 = arith.constant 0 : index
    %0 = vector.load %arg2[%c0, %c0_0, %c0_1] : memref<1x8x32xf32, #tpu.memory_space<vmem>>, vector<1x8x32xf32>
    %cst = arith.constant 0.699999988 : f32
    %1 = vector.broadcast %cst : f32 to vector<1x8x32xf32>
    %2 = arith.mulf %0, %1 : vector<1x8x32xf32>
    %cst_2 = arith.constant dense<0xFF800000> : vector<1x32xf32>
    %3 = vector.multi_reduction <maximumf>, %2, %cst_2 [1] : vector<1x8x32xf32> to vector<1x32xf32>
    %4 = vector.shape_cast %3 : vector<1x32xf32> to vector<1x1x32xf32>
    %5 = vector.broadcast %4 : vector<1x1x32xf32> to vector<1x8x32xf32>
    %6 = arith.subf %2, %5 : vector<1x8x32xf32>
    %7 = math.exp %6 : vector<1x8x32xf32>
    %cst_3 = arith.constant dense<0.000000e+00> : vector<1x32xf32>
    %8 = vector.multi_reduction <add>, %7, %cst_3 [1] : vector<1x8x32xf32> to vector<1x32xf32>
    %9 = vector.shape_cast %8 : vector<1x32xf32> to vector<1x1x32xf32>
    %10 = tpu.reciprocal %9 : vector<1x1x32xf32> -> vector<1x1x32xf32>
    %11 = vector.broadcast %10 : vector<1x1x32xf32> to vector<1x8x32xf32>
    %12 = arith.mulf %7, %11 : vector<1x8x32xf32>
    %c0_4 = arith.constant 0 : index
    %c0_5 = arith.constant 0 : index
    %c0_6 = arith.constant 0 : index
    %13 = vector.load %arg3[%c0_4, %c0_5, %c0_6] : memref<1x8x32xf32, #tpu.memory_space<vmem>>, vector<1x8x32xf32>
    tpu.vector_store %arg3[%c0_4, %c0_5, %c0_6], %12 {strides = array<i32>} : memref<1x8x32xf32, #tpu.memory_space<vmem>>, vector<1x8x32xf32>,
    return
  }
  func.func @transform_0(%arg0: i32, %arg1: i32) -> (i32, i32, i32) {
    %c0_i32 = arith.constant 0 : i32
    %c0_i32_0 = arith.constant 0 : i32
    return %arg0, %c0_i32, %arg1 : i32, i32, i32
  }
  func.func @transform_1(%arg0: i32, %arg1: i32) -> (i32, i32, i32) {
    %c0_i32 = arith.constant 0 : i32
    %c0_i32_0 = arith.constant 0 : i32
    return %arg0, %c0_i32, %arg1 : i32, i32, i32
  }
}

</mosaic_0001>

<llo_original>
// kernel: tpu_custom_call.1
$region0: #{tpu_custom_call.1}
  #allocation0 [shape = 'u32[]', space=smem, size = 0x4, offset = 0x4, fixed_abs, tag = 'smem constant byte address 0x4 - core index']
  #allocation1 [shape = 'u32[72,128]{1,0:T(1,128)}', space=vmem, size = 0x9000, scoped, tag = 'internal scratch']
  %s0 = inlined_call_operand.hbm [shape: f32[1,8,32], index: 0, kind: input, shape index: {}]
  %s1 = inlined_call_operand.hbm [shape: f32[1,8,32], index: 1, kind: output, shape index: {}]
  %s2 = sld [smem:[#allocation0]]
  $region18: #{tpu_custom_call.1} parent=0
    _
  %s4 = ssub.s32 1, %s2
  %s5 = scalar_select 0, %s4, %s2
  $region1: #{tpu_custom_call.1} parent=0
    #allocation2 [shape = 'u8[4096]{0}', space=vmem, size = 0x1000, scoped, tag = 'input window, operand 0, single buffered']
    #allocation3 [shape = 's32[1]{0}', space=sflag, size = 0x4, scoped, tag = 'scoped memory for tpu_custom_call.1']
    #allocation4 [shape = 's32[1]{0}', space=sflag, size = 0x4, scoped, tag = 'scoped memory for tpu_custom_call.1']
    #allocation5 [shape = 'u8[4096]{0}', space=vmem, size = 0x1000, scoped, tag = 'output window, operand 0, single buffered']
    %6 = vsyncpa [#allocation3], 0
    %7 = vsyncpa [#allocation4], 0
    // Predicated region
    $region2: #{tpu_custom_call.1} parent=1 // pred_check
      _
    $region3: #{tpu_custom_call.1} parent=1 // pred_check_branch
      %9 = sbr.rel (0) target = $region5
    $region4: #{tpu_custom_call.1} parent=1 // pred_region
      %11 = vsyncadd [#allocation3], 0
      %s13 = sshll.u32 %s0, 4
      %s14 = int_to_ptr.hbm [resolvable:$true] %s13
      %s15 = sshll.u32 [#allocation2], 4
      %s16 = int_to_ptr.vmem [resolvable:$true] %s15
      %18 = dma.hbm_to_vmem [thread:$0]  %s14, 128, %s16, [#allocation3]
    $region5: #{tpu_custom_call.1} parent=1 // pred_fallthru
      _
    // Predicated region
    $region6: #{tpu_custom_call.1} parent=1 // pred_check
      _
    $region7: #{tpu_custom_call.1} parent=1 // pred_check_branch
      %20 = sbr.rel (0) target = $region9
    $region8: #{tpu_custom_call.1} parent=1 // pred_region
      %22 = dma.done [#allocation3], 128
    $region9: #{tpu_custom_call.1} parent=1 // pred_fallthru
      _
    %v23 = vld [vmem:[#allocation2] sm:$0xff]
    %v24 = vmul.f32 %v23, 0.7
    %vm25 = vcmask 261120
    %v26 = vsel %vm25, %v24, -inf
    %v27 = vrot.slane %v26, 4
    %v28 = vmax.f32 %v26, %v27
    %v29 = vrot.slane %v28, 2
    %v30 = vmax.f32 %v28, %v29
    %v31 = vrot.slane %v30, 1
    %v32 = vmax.f32 %v30, %v31
    %v33 = vsub.f32 %v24, %v32
    %v34 = vmul.f32 %v33, 1.442695
    %v35 = vpow.pop %v34
    %v36 = vsel %vm25, %v35, 0.0
    %v37 = vrot.slane %v36, 4
    %v38 = vadd.f32 %v36, %v37
    %v39 = vrot.slane %v38, 2
    %v40 = vadd.f32 %v38, %v39
    %v41 = vrot.slane %v40, 1
    %v42 = vadd.f32 %v40, %v41
    %v43 = vrcp.pop %v42
    %v44 = vmul.f32 %v42, %v43
    %v45 = vsub.f32 1.0, %v44
    %v46 = vmul.f32 %v43, %v45
    %v47 = vadd.f32 %v43, %v46
    %vm48 = vweird.f32 %v42
    %vm49 = vweird.f32 %v43
    %vm50 = vmor %vm48, %vm49
    %v51 = vsel %vm50, %v43, %v47
    %v52 = vand.u32 2147483647, %v42
    %vm53 = vcmp.eq.f32.partialorder %v52, 8.507059e+37
    %v54 = vand.u32 %v42, 2147483648
    %v55 = vor.u32 1.1754944e-38, %v54
    %v56 = vsel %vm53, %v55, %v51
    %v57 = vmul.f32 %v35, %v56
    %58 = vst.msk [vmem:[#allocation5] sm:$0xff] %vm25, %v57
    // Predicated region
    $region10: #{tpu_custom_call.1} parent=1 // pred_check
      _
    $region11: #{tpu_custom_call.1} parent=1 // pred_check_branch
      %60 = sbr.rel (0) target = $region13
    $region12: #{tpu_custom_call.1} parent=1 // pred_region
      %62 = vsyncadd [#allocation4], 0
      %s64 = sshll.u32 [#allocation5], 4
      %s65 = int_to_ptr.vmem [resolvable:$true] %s64
      %s66 = sshll.u32 %s1, 4
      %s67 = int_to_ptr.hbm [resolvable:$true] %s66
      %69 = dma.vmem_to_hbm [thread:$0]  %s65, 128, %s67, [#allocation4]
    $region13: #{tpu_custom_call.1} parent=1 // pred_fallthru
      _
    // Predicated region
    $region14: #{tpu_custom_call.1} parent=1 // pred_check
      _
    $region15: #{tpu_custom_call.1} parent=1 // pred_check_branch
      %71 = sbr.rel (0) target = $region17
    $region16: #{tpu_custom_call.1} parent=1 // pred_region
      %73 = dma.done [#allocation4], 128
    $region17: #{tpu_custom_call.1} parent=1 // pred_fallthru
      _
    %74 = vsyncpa [#allocation3], 1
    %75 = vsyncpa [#allocation4], 1

</llo_original>
